<compile_context>
chip_gen: v7x
topology: tpu7x:2x2x1
jax: 0.10.0
libtpu: 0.0.40
codegen_flags: <defaults>
</compile_context>

<pallas_src>
import functools
import math

import jax
import jax.numpy as jnp
from jax import lax
from jax.experimental import pallas as pl
from jax.experimental.pallas import tpu as pltpu


_VMEM_LIMIT = 48 * 1024 * 1024


def _round_up(v, m):
    return ((v + m - 1) // m) * m


def _tile_m(m):
    if m <= 256:
        return m, m
    mp = _round_up(m, 8)
    for t in range(256, 7, -8):
        if mp % t == 0:
            return t, mp
    return 256, _round_up(mp, 256)


def _tile_n(n):
    np_ = _round_up(n, 128)
    for t in (512, 384, 256, 128):
        if np_ % t == 0:
            return t, np_
    return 128, np_


def _tile_k(k):
    if k <= 512:
        return k, k
    kp = _round_up(k, 128)
    for t in (512, 384, 256, 128):
        if kp % t == 0:
            return t, kp
    return 128, kp


# ----------------------------------------------------------------------------
# Pallas kernels
# ----------------------------------------------------------------------------
def _mm_kernel(a_ref, b_ref, bias_ref, *rest, relu, has_res):
    """Tiled bf16 matmul with f32 acc + fused bias / residual add / ReLU."""
    if has_res:
        res_ref, o_ref, acc_ref = rest
    else:
        o_ref, acc_ref = rest

    @pl.when(pl.program_id(2) == 0)
    def _():
        acc_ref[...] = jnp.zeros_like(acc_ref)

    acc_ref[...] += jnp.dot(a_ref[...], b_ref[...],
                            preferred_element_type=jnp.float32)

    @pl.when(pl.program_id(2) == pl.num_programs(2) - 1)
    def _():
        r = acc_ref[...] + bias_ref[...]
        if has_res:
            r = r + res_ref[...].astype(jnp.float32)
        if relu:
            r = jnp.maximum(r, 0.0)
        o_ref[...] = r.astype(o_ref.dtype)


def _conv3x3_s1_kernel(x_ref, w_ref, b_ref, o_ref, acc_ref, *, relu):
    """Implicit-im2col 3x3 stride-1 pad-1 conv.

    x_ref:  (1, H+2, W+2, CK)  bf16   padded input plane, Cin-block CK
    w_ref:  (9, CK, Cout)      bf16   tap-major weights
    b_ref:  (1, Cout)          f32
    o_ref:  (1, H, W, Cout)    bf16   (resident across the Cin grid axis)
    acc_ref:(H, W, Cout)       f32
    """
    kb = pl.program_id(1)
    h_out = acc_ref.shape[0]
    w_out = acc_ref.shape[1]
    c_out = acc_ref.shape[2]

    @pl.when(kb == 0)
    def _():
        acc_ref[...] = jnp.zeros_like(acc_ref)

    def row_body(h, carry):
        band = x_ref[0, pl.ds(h, 3), :, :]          # (3, W+2, CK)
        part = jnp.zeros((w_out, c_out), jnp.float32)
        for i in range(3):
            for j in range(3):
                a = band[i, j:j + w_out, :]          # (W, CK)
                part = part + jnp.dot(a, w_ref[3 * i + j],
                                      preferred_element_type=jnp.float32)
        acc_ref[h] = acc_ref[h] + part
        return carry

    lax.fori_loop(0, h_out, row_body, 0, unroll=(h_out <= 4))

    @pl.when(kb == pl.num_programs(1) - 1)
    def _():
        r = acc_ref[...] + b_ref[...]
        if relu:
            r = jnp.maximum(r, 0.0)
        o_ref[0] = r.astype(o_ref.dtype)


# ----------------------------------------------------------------------------
# Pallas-call wrappers
# ----------------------------------------------------------------------------
def _matmul(a, b, bias, *, relu, res=None, out_dtype=jnp.bfloat16):
    """a:(M,K) @ b:(K,N) + bias (+ res) with optional ReLU; bf16 MXU, f32 acc."""
    m, k = a.shape
    _, n = b.shape
    tm, mp = _tile_m(m)
    tn, np_ = _tile_n(n)
    tk, kp = _tile_k(k)

    a = a.astype(jnp.bfloat16)
    b = b.astype(jnp.bfloat16)
    if (mp, kp) != (m, k):
        a = jnp.pad(a, ((0, mp - m), (0, kp - k)))
    if (kp, np_) != (k, n):
        b = jnp.pad(b, ((0, kp - k), (0, np_ - n)))
    bias_p = jnp.pad(bias.astype(jnp.float32), (0, np_ - n)).reshape(1, np_)

    has_res = res is not None
    in_specs = [
        pl.BlockSpec((tm, tk), lambda i, j, kk: (i, kk)),
        pl.BlockSpec((tk, tn), lambda i, j, kk: (kk, j)),
        pl.BlockSpec((1, tn), lambda i, j, kk: (0, j)),
    ]
    operands = [a, b, bias_p]
    if has_res:
        r2 = res.astype(jnp.bfloat16)
        if (mp, np_) != (m, n):
            r2 = jnp.pad(r2, ((0, mp - m), (0, np_ - n)))
        in_specs.append(pl.BlockSpec((tm, tn), lambda i, j, kk: (i, j)))
        operands.append(r2)

    out = pl.pallas_call(
        functools.partial(_mm_kernel, relu=relu, has_res=has_res),
        out_shape=jax.ShapeDtypeStruct((mp, np_), out_dtype),
        grid_spec=pltpu.PrefetchScalarGridSpec(
            num_scalar_prefetch=0,
            grid=(mp // tm, np_ // tn, kp // tk),
            in_specs=in_specs,
            out_specs=pl.BlockSpec((tm, tn), lambda i, j, kk: (i, j)),
            scratch_shapes=[pltpu.VMEM((tm, tn), jnp.float32)],
        ),
        compiler_params=pltpu.CompilerParams(
            dimension_semantics=("parallel", "parallel", "arbitrary"),
            vmem_limit_bytes=_VMEM_LIMIT),
    )(*operands)
    if (mp, np_) != (m, n):
        out = out[:m, :n]
    return out


@functools.partial(jax.jit, static_argnames=("stride", "relu", "out_dtype"))
def conv1x1(x, w, b, residual=None, *, stride=1, relu=True,
            out_dtype=jnp.bfloat16):
    """1x1 conv as a direct matmul; optional fused residual add (+ReLU)."""
    x = x.astype(jnp.bfloat16)
    if stride > 1:
        x = x[:, ::stride, ::stride, :]
    n, h, wd, cin = x.shape
    cout = w.shape[-1]
    a = x.reshape(n * h * wd, cin)
    res2 = None
    if residual is not None:
        res2 = residual.reshape(n * h * wd, cout)
    out = _matmul(a, w, b, relu=relu, res=res2, out_dtype=out_dtype)
    return out.reshape(n, h, wd, cout)


@functools.partial(jax.jit, static_argnames=("relu",))
def conv3x3_s1(x, w, b, *, relu=True):
    """3x3 stride-1 pad-1 conv via the implicit-im2col Pallas kernel."""
    x = x.astype(jnp.bfloat16)
    n, h, wd, cin = x.shape
    cout = w.shape[-1]
    xp = jnp.pad(x, ((0, 0), (1, 1), (1, 1), (0, 0)))

    ck = cin
    if cin > 512:
        for t in (512, 384, 256, 128):
            if cin % t == 0:
                ck = t
                break
    kb = cin // ck
    bias2 = b.astype(jnp.float32).reshape(1, cout)

    out = pl.pallas_call(
        functools.partial(_conv3x3_s1_kernel, relu=relu),
        out_shape=jax.ShapeDtypeStruct((n, h, wd, cout), jnp.bfloat16),
        grid_spec=pltpu.PrefetchScalarGridSpec(
            num_scalar_prefetch=0,
            grid=(n, kb),
            in_specs=[
                pl.BlockSpec((1, h + 2, wd + 2, ck),
                             lambda ni, ki: (ni, 0, 0, ki)),
                pl.BlockSpec((9, ck, cout), lambda ni, ki: (0, ki, 0)),
                pl.BlockSpec((1, cout), lambda ni, ki: (0, 0)),
            ],
            out_specs=pl.BlockSpec((1, h, wd, cout),
                                   lambda ni, ki: (ni, 0, 0, 0)),
            scratch_shapes=[pltpu.VMEM((h, wd, cout), jnp.float32)],
        ),
        compiler_params=pltpu.CompilerParams(
            dimension_semantics=("parallel", "arbitrary"),
            vmem_limit_bytes=_VMEM_LIMIT),
    )(xp, w.astype(jnp.bfloat16), bias2)
    return out


@functools.partial(jax.jit, static_argnames=("ksize", "stride", "pad", "relu"))
def conv_im2col(x, w, b, *, ksize, stride, pad, relu):
    """Fallback explicit-im2col conv (7x7 stem + 3 stride-2 3x3 downsamples only)."""
    x = x.astype(jnp.bfloat16)
    n, h, wd, cin = x.shape
    cout = w.shape[-1]
    ho = (h + 2 * pad - ksize) // stride + 1
    wo = (wd + 2 * pad - ksize) // stride + 1
    xp = jnp.pad(x, ((0, 0), (pad, pad), (pad, pad), (0, 0)))
    cols = []
    for i in range(ksize):
        for j in range(ksize):
            cols.append(xp[:, i:i + stride * (ho - 1) + 1:stride,
                           j:j + stride * (wo - 1) + 1:stride, :])
    patches = jnp.concatenate(cols, axis=-1)
    a = patches.reshape(n * ho * wo, ksize * ksize * cin)
    out2d = _matmul(a, w, b, relu=relu)
    return out2d.reshape(n, ho, wo, cout)


# ----------------------------------------------------------------------------
# Memory-layout glue (plain JAX)
# ----------------------------------------------------------------------------
@jax.jit
def maxpool3x3_s2(x):
    """MaxPool2d(kernel=3, stride=2, padding=1) on NHWC."""
    n, h, w, c = x.shape
    ho = (h + 2 - 3) // 2 + 1
    wo = (w + 2 - 3) // 2 + 1
    xp = jnp.pad(x, ((0, 0), (1, 1), (1, 1), (0, 0)),
                 constant_values=-jnp.inf)
    out = None
    for i in range(3):
        for j in range(3):
            v = xp[:, i:i + 2 * (ho - 1) + 1:2, j:j + 2 * (wo - 1) + 1:2, :]
            out = v if out is None else jnp.maximum(out, v)
    return out


@functools.partial(jax.jit, static_argnames=("ho", "wo"))
def upsample_bilinear_ac(x, ho, wo):
    """F.interpolate(mode='bilinear', align_corners=True) on NHWC."""
    n, h, w, c = x.shape
    if (h, w) == (ho, wo):
        return x

    def grid(n_in, n_out):
        if n_out == 1:
            z = jnp.zeros((1,), jnp.int32)
            return jnp.zeros((1,), x.dtype), z, z
        pos = jnp.arange(n_out, dtype=jnp.float32) * ((n_in - 1) / (n_out - 1))
        i0 = jnp.clip(jnp.floor(pos).astype(jnp.int32), 0, n_in - 1)
        i1 = jnp.minimum(i0 + 1, n_in - 1)
        return (pos - i0.astype(jnp.float32)).astype(x.dtype), i0, i1

    wy, y0, y1 = grid(h, ho)
    wx, x0, x1 = grid(w, wo)
    top = x[:, y0]
    bot = x[:, y1]
    rows = top * (1 - wy)[None, :, None, None] + bot * wy[None, :, None, None]
    left = rows[:, :, x0]
    right = rows[:, :, x1]
    return left * (1 - wx)[None, None, :, None] + right * wx[None, None, :, None]


# ----------------------------------------------------------------------------
# Deterministic parameter initialization
# ----------------------------------------------------------------------------
class _KeyGen:
    def __init__(self, seed):
        self._base = jax.random.PRNGKey(seed)
        self._n = 0

    def __call__(self):
        self._n += 1
        return jax.random.fold_in(self._base, self._n)


_BN_FOLD_SCALE = 1.0 / math.sqrt(1.0 + 1e-5)   # eval-mode BN with default stats


def _conv_params(kg, cin, cout, k, *, bias=True, bn_fold=False, taps=False):
    fan_in = k * k * cin
    w = jax.random.normal(kg(), (k * k * cin, cout), jnp.float32)
    w = w * math.sqrt(2.0 / fan_in)
    if bn_fold:
        w = w * _BN_FOLD_SCALE
    if taps:
        w = w.reshape(k * k, cin, cout)        # tap-major layout for implicit im2col
    w = w.astype(jnp.bfloat16)
    if bias:
        b = jax.random.normal(kg(), (cout,), jnp.float32) * 0.01
    else:
        b = jnp.zeros((cout,), jnp.float32)
    return w, b


def init_encoder(kg):
    """ResNet-101: stem + bottleneck stages [3, 4, 23, 3]."""
    params = {"stem": _conv_params(kg, 3, 64, 7, bias=False, bn_fold=True)}
    cfg = [(64, 3, 1), (128, 4, 2), (256, 23, 2), (512, 3, 2)]
    layers = []
    in_ch = 64
    for planes, n_blocks, stride in cfg:
        blocks = []
        for bi in range(n_blocks):
            s = stride if bi == 0 else 1
            out_ch = planes * 4
            blk = {
                "c1": _conv_params(kg, in_ch, planes, 1, bias=False, bn_fold=True),
                "c2": _conv_params(kg, planes, planes, 3, bias=False, bn_fold=True,
                                   taps=(s == 1)),
                "c3": _conv_params(kg, planes, out_ch, 1, bias=False, bn_fold=True),
                "down": (_conv_params(kg, in_ch, out_ch, 1, bias=False, bn_fold=True)
                         if (s != 1 or in_ch != out_ch) else None),
                "stride": s,
            }
            blocks.append(blk)
            in_ch = out_ch
        layers.append(blocks)
    params["layers"] = layers
    return params


def init_decoder(kg):
    def double_conv(cin, cout):
        return (_conv_params(kg, cin, cout, 3, bias=True, taps=True),
                _conv_params(kg, cout, cout, 3, bias=True, taps=True))

    return {
        "conv1": double_conv(3072, 512),
        "conv2": double_conv(1024, 256),
        "conv3": double_conv(512, 128),
        "conv4": double_conv(192, 64),
        "out": _conv_params(kg, 64, 1, 1, bias=True),
    }


# ----------------------------------------------------------------------------
# Forward pass
# ----------------------------------------------------------------------------
def _bottleneck(x, blk):
    s = blk["stride"]
    if blk["down"] is not None:
        wd, bd = blk["down"]
        identity = conv1x1(x, wd, bd, stride=s, relu=False)
    else:
        identity = x
    w, b = blk["c1"]
    out = conv1x1(x, w, b, stride=1, relu=True)
    w, b = blk["c2"]
    if s == 1:
        out = conv3x3_s1(out, w, b, relu=True)
    else:
        out = conv_im2col(out, w, b, ksize=3, stride=s, pad=1, relu=True)
    w, b = blk["c3"]
    # residual add + final ReLU fused into the 1x1 matmul epilogue
    out = conv1x1(out, w, b, residual=identity, stride=1, relu=True)
    return out


def encoder_forward(params, x):
    skips = []
    w, b = params["stem"]
    x = conv_im2col(x, w, b, ksize=7, stride=2, pad=3, relu=True)  # conv1+bn1+relu
    skips.append(x)
    x = maxpool3x3_s2(x)
    for layer in params["layers"]:
        for blk in layer:
            x = _bottleneck(x, blk)
        skips.append(x)
    return skips


def _double_conv(x, p):
    (w1, b1), (w2, b2) = p
    x = conv3x3_s1(x, w1, b1, relu=True)
    x = conv3x3_s1(x, w2, b2, relu=True)
    return x


def decoder_forward(params, skips):
    # TODO(synk): the skip-concat is still materialized; splitting the first conv's
    #             K contraction over the two sources would remove that HBM traffic.
    x = upsample_bilinear_ac(skips[-1], skips[-2].shape[1], skips[-2].shape[2])
    x = jnp.concatenate([x, skips[-2]], axis=-1)
    x = _double_conv(x, params["conv1"])
    x = upsample_bilinear_ac(x, skips[-3].shape[1], skips[-3].shape[2])
    x = jnp.concatenate([x, skips[-3]], axis=-1)
    x = _double_conv(x, params["conv2"])
    x = upsample_bilinear_ac(x, skips[-4].shape[1], skips[-4].shape[2])
    x = jnp.concatenate([x, skips[-4]], axis=-1)
    x = _double_conv(x, params["conv3"])
    x = upsample_bilinear_ac(x, skips[-5].shape[1], skips[-5].shape[2])
    x = jnp.concatenate([x, skips[-5]], axis=-1)
    x = _double_conv(x, params["conv4"])
    w, b = params["out"]
    x = conv1x1(x, w, b, stride=1, relu=False, out_dtype=jnp.float32)
    return x


def resunet_forward(enc_params, dec_params, x_nchw):
    x = jnp.transpose(x_nchw, (0, 2, 3, 1)).astype(jnp.bfloat16)   # NCHW -> NHWC
    skips = encoder_forward(enc_params, x)
    y = decoder_forward(dec_params, skips)
    return jnp.transpose(y, (0, 3, 1, 2))                          # NHWC -> NCHW


# ----------------------------------------------------------------------------
# Main
# ----------------------------------------------------------------------------
if __name__ == "__main__":
    x = jax.random.normal(jax.random.PRNGKey(0), (2, 3, 64, 64), jnp.float32)

    kg = _KeyGen(0)
    enc_params = init_encoder(kg)
    dec_params = init_decoder(kg)

    out = resunet_forward(enc_params, dec_params, x)
    out = jax.block_until_ready(out)

    assert out.shape == (2, 1, 32, 32), out.shape
    assert bool(jnp.all(jnp.isfinite(out)))
    print("KERNEL_OK")
</pallas_src>

<mosaic_0001>
module attributes {stable_mosaic.version = 11 : i64} {
  func.func @_mm_kernel(%arg0: i32, %arg1: i32, %arg2: i32, %arg3: memref<256x147xbf16, #tpu.memory_space<vmem>>, %arg4: memref<147x128xbf16, #tpu.memory_space<vmem>>, %arg5: memref<1x128xf32, #tpu.memory_space<vmem>>, %arg6: memref<256x128xbf16, #tpu.memory_space<vmem>>, %arg7: memref<256x128xf32, #tpu.memory_space<vmem>>) attributes {dimension_semantics = [#tpu.dimension_semantics<parallel>, #tpu.dimension_semantics<parallel>, #tpu.dimension_semantics<arbitrary>], iteration_bounds = array<i64: 8, 1, 1>, scalar_prefetch = 0 : i64, scratch_operands = 1 : i64, tpu.core_type = #tpu.core_type<tc>, window_params = [{transform_indices = @transform_0, window_bounds = array<i64: 256, 147>}, {transform_indices = @transform_1, window_bounds = array<i64: 147, 128>}, {transform_indices = @transform_2, window_bounds = array<i64: 1, 128>}, {transform_indices = @transform_3, window_bounds = array<i64: 256, 128>}]} {
    %c0_i32 = arith.constant 0 : i32
    %0 = arith.cmpi eq, %arg2, %c0_i32 : i32
    %1 = arith.extui %0 : i1 to i32
    %c0_i32_0 = arith.constant 0 : i32
    %2 = arith.cmpi ne, %1, %c0_i32_0 : i32
    scf.if %2 {
      %cst_10 = arith.constant 0.000000e+00 : f32
      %12 = vector.broadcast %cst_10 : f32 to vector<256x128xf32>
      %c0_11 = arith.constant 0 : index
      %c0_12 = arith.constant 0 : index
      %13 = vector.load %arg7[%c0_11, %c0_12] : memref<256x128xf32, #tpu.memory_space<vmem>>, vector<256x128xf32>
      tpu.vector_store %arg7[%c0_11, %c0_12], %12 {strides = array<i32>} : memref<256x128xf32, #tpu.memory_space<vmem>>, vector<256x128xf32>,
    } else {
    }
    %c0 = arith.constant 0 : index
    %c0_1 = arith.constant 0 : index
    %3 = vector.load %arg7[%c0, %c0_1] : memref<256x128xf32, #tpu.memory_space<vmem>>, vector<256x128xf32>
    %c0_2 = arith.constant 0 : index
    %c0_3 = arith.constant 0 : index
    %4 = vector.load %arg3[%c0_2, %c0_3] : memref<256x147xbf16, #tpu.memory_space<vmem>>, vector<256x147xbf16>
    %c0_4 = arith.constant 0 : index
    %c0_5 = arith.constant 0 : index
    %5 = vector.load %arg4[%c0_4, %c0_5] : memref<147x128xbf16, #tpu.memory_space<vmem>>, vector<147x128xbf16>
    %cst = arith.constant dense<0.000000e+00> : vector<256x128xf32>
    %6 = tpu.matmul %4, %5, %cst {dimension_numbers = #tpu.dot_dimension_numbers<[1], [0], [0], [1], [0, 0, 1, 1], [], []>} : vector<256x147xbf16>, vector<147x128xbf16>, vector<256x128xf32> -> vector<256x128xf32>
    %7 = arith.addf %3, %6 : vector<256x128xf32>
    %c0_6 = arith.constant 0 : index
    %c0_7 = arith.constant 0 : index
    %8 = vector.load %arg7[%c0_6, %c0_7] : memref<256x128xf32, #tpu.memory_space<vmem>>, vector<256x128xf32>
    tpu.vector_store %arg7[%c0_6, %c0_7], %7 {strides = array<i32>} : memref<256x128xf32, #tpu.memory_space<vmem>>, vector<256x128xf32>,
    %c0_i32_8 = arith.constant 0 : i32
    %9 = arith.cmpi eq, %arg2, %c0_i32_8 : i32
    %10 = arith.extui %9 : i1 to i32
    %c0_i32_9 = arith.constant 0 : i32
    %11 = arith.cmpi ne, %10, %c0_i32_9 : i32
    scf.if %11 {
      %c0_10 = arith.constant 0 : index
      %c0_11 = arith.constant 0 : index
      %12 = vector.load %arg7[%c0_10, %c0_11] : memref<256x128xf32, #tpu.memory_space<vmem>>, vector<256x128xf32>
      %c0_12 = arith.constant 0 : index
      %c0_13 = arith.constant 0 : index
      %13 = vector.load %arg5[%c0_12, %c0_13] : memref<1x128xf32, #tpu.memory_space<vmem>>, vector<1x128xf32>
      %14 = vector.broadcast %13 : vector<1x128xf32> to vector<256x128xf32>
      %15 = arith.addf %12, %14 : vector<256x128xf32>
      %cst_14 = arith.constant 0.000000e+00 : f32
      %16 = vector.broadcast %cst_14 : f32 to vector<256x128xf32>
      %17 = arith.maximumf %15, %16 : vector<256x128xf32>
      %18 = arith.truncf %17 : vector<256x128xf32> to vector<256x128xbf16>
      %c0_15 = arith.constant 0 : index
      %c0_16 = arith.constant 0 : index
      %19 = vector.load %arg6[%c0_15, %c0_16] : memref<256x128xbf16, #tpu.memory_space<vmem>>, vector<256x128xbf16>
      tpu.vector_store %arg6[%c0_15, %c0_16], %18 {strides = array<i32>} : memref<256x128xbf16, #tpu.memory_space<vmem>>, vector<256x128xbf16>,
    } else {
    }
    return
  }
  func.func @transform_0(%arg0: i32, %arg1: i32, %arg2: i32) -> (i32, i32) {
    %c0_i32 = arith.constant 0 : i32
    return %arg0, %arg2 : i32, i32
  }
  func.func @transform_1(%arg0: i32, %arg1: i32, %arg2: i32) -> (i32, i32) {
    %c0_i32 = arith.constant 0 : i32
    return %arg2, %arg1 : i32, i32
  }
  func.func @transform_2(%arg0: i32, %arg1: i32, %arg2: i32) -> (i32, i32) {
    %c0_i32 = arith.constant 0 : i32
    %c0_i32_0 = arith.constant 0 : i32
    return %c0_i32, %arg1 : i32, i32
  }
  func.func @transform_3(%arg0: i32, %arg1: i32, %arg2: i32) -> (i32, i32) {
    %c0_i32 = arith.constant 0 : i32
    return %arg0, %arg1 : i32, i32
  }
}

</mosaic_0001>

<llo_original>
// kernel: conv_im2col.1
$region0: #{conv_im2col.1}
  #allocation0 [shape = 'u32[]', space=smem, size = 0x4, offset = 0x4, fixed_abs, tag = 'smem constant byte address 0x4 - core index']
  #allocation1 [shape = 'u32[144,128]{1,0:T(1,128)}', space=vmem, size = 0x12000, scoped, tag = 'internal scratch']
  #allocation2 [shape = 'f32[256,128]{1,0:T(8,128)}', space=vmem, size = 0x20000, scoped, tag = 'scratch operand']
  %s0 = inlined_call_operand.vmem [shape: bf16[2048,147], index: 0, kind: input, shape index: {}]
  %s1 = inlined_call_operand.vmem [shape: bf16[147,128], index: 1, kind: input, shape index: {}]
  %s2 = inlined_call_operand.vmem [shape: f32[1,128], index: 2, kind: input, shape index: {}]
  %s3 = inlined_call_operand.hbm [shape: bf16[2048,128], index: 3, kind: output, shape index: {}]
  %s4 = sld [smem:[#allocation0]]
  $region53: #{conv_im2col.1} parent=0
    _
  %s6 = ssub.s32 1, %s4
  %s7 = scalar_select 0, %s6, %s4
  $region1: #{conv_im2col.1} parent=0
    #allocation3 [shape = 'u8[131072]{0}', space=vmem, size = 0x20000, scoped, tag = 'output window, operand 0']
    #allocation4 [shape = 's32[2]{0}', space=sflag, size = 0x8, scoped, tag = 'scoped memory for conv_im2col.1']
    %8 = vsyncpa [#allocation4], 0
    %s9 = scalar_lea.sflag [#allocation4], 1
    %10 = vsyncpa %s9, 0
    loop: start=0, step=1, limit=10
    $region2: #{conv_im2col.1} parent=1 // loop_pre_header
      _
    $region3: #{conv_im2col.1} parent=1 // loop_header
      %s12 = sphi 0, %s16
      %p13 = scmp.ge.s32.totalorder %s12, 10
      %s19 = sphi 0, %s38
      %s20 = sphi 0, %s34
      %s21 = sphi 0, %s30
      %s22 = sphi 0, %s19
      %s23 = sphi 0, %s20
      %s24 = sphi 0, %s21
      %s25 = sphi 0, %s22
      %s26 = sphi 0, %s23
      %s27 = sphi 0, %s24
      %s43 = sphi 0, %s45
      %s46 = sphi 0, %s43
      %s47 = sphi 0, %s46
      %s63 = sphi 0, %s47
      %s71 = sphi 0, %s73
      %s74 = sphi 0, %s71
      %s75 = sphi 0, %s74
      %s91 = sphi 0, %s75
      %s97 = sphi 0, %s99
      %s100 = sphi 0, %s97
      %s101 = sphi 0, %s100
      %s117 = sphi 0, %s101
      %s125 = sphi 0, %s127
      %s128 = sphi 0, %s125
      %s129 = sphi 0, %s128
      %s145 = sphi 0, %s129
    $region4: #{conv_im2col.1} parent=1 // loop_header_branch
      %15 = sbr.rel (%p13) target = $region8
    $region5: #{conv_im2col.1} parent=1 // loop_body
      %s17 = ssub.s32 %s12, 1
      %s18 = ssub.s32 %s12, 2
      %s28 = sadd.s32 1, %s21
      %p29 = scmp.ge.s32.totalorder %s28, 1
      %s30 = scalar_select %p29, 0, %s28
      %s31 = sadd.s32 1, %s20
      %s32 = scalar_select %p29, %s31, %s20
      %p33 = scmp.ge.s32.totalorder %s32, 1
      %s34 = scalar_select %p33, 0, %s32
      %s35 = sadd.s32 1, %s19
      %s36 = scalar_select %p33, %s35, %s19
      %p37 = scmp.ge.s32.totalorder %s36, 8
      %s38 = scalar_select %p37, 0, %s36
      %s39 = ssub.s32 %s19, %s38
      %s40 = ssub.s32 %s21, %s30
      %s41 = sor.u32 %s39, %s40
      %p42 = scmp.eq.s32.totalorder %s41, 0
      %s44 = sadd.s32 %s43, 1
      %s45 = scalar_select %p42, %s43, %s44
      %p48 = pneg %p42
      %p49 = scmp.eq.s32.totalorder %s12, 7
      %p50 = por %p48, %p49
      %p51 = scmp.ne.s32.totalorder %s43, %s46
      %p52 = scmp.eq.s32.totalorder %s12, 0
      %p53 = por %p51, %p52
      %p54 = scmp.ne.s32.totalorder %s43, %s46
      %p55 = scmp.eq.s32.totalorder %s17, 7
      %p56 = por %p54, %p55
      %p57 = scmp.ne.s32.totalorder %s46, %s47
      %p58 = scmp.eq.s32.totalorder %s17, 0
      %p59 = por %p57, %p58
      %p60 = scmp.ne.s32.totalorder %s46, %s47
      %p61 = scmp.eq.s32.totalorder %s18, 7
      %p62 = por %p60, %p61
      %p64 = scmp.ne.s32.totalorder %s47, %s63
      %p65 = scmp.eq.s32.totalorder %s18, 0
      %p66 = por %p64, %p65
      %s67 = ssub.s32 %s21, %s30
      %s68 = ssub.s32 %s20, %s34
      %s69 = sor.u32 %s67, %s68
      %p70 = scmp.eq.s32.totalorder %s69, 0
      %s72 = sadd.s32 %s71, 1
      %s73 = scalar_select %p70, %s71, %s72
      %p76 = pneg %p70
      %p77 = scmp.eq.s32.totalorder %s12, 7
      %p78 = por %p76, %p77
      %p79 = scmp.ne.s32.totalorder %s71, %s74
      %p80 = scmp.eq.s32.totalorder %s12, 0
      %p81 = por %p79, %p80
      %p82 = scmp.ne.s32.totalorder %s71, %s74
      %p83 = scmp.eq.s32.totalorder %s17, 7
      %p84 = por %p82, %p83
      %p85 = scmp.ne.s32.totalorder %s74, %s75
      %p86 = scmp.eq.s32.totalorder %s17, 0
      %p87 = por %p85, %p86
      %p88 = scmp.ne.s32.totalorder %s74, %s75
      %p89 = scmp.eq.s32.totalorder %s18, 7
      %p90 = por %p88, %p89
      %p92 = scmp.ne.s32.totalorder %s75, %s91
      %p93 = scmp.eq.s32.totalorder %s18, 0
      %p94 = por %p92, %p93
      %s95 = ssub.s32 %s20, %s34
      %p96 = scmp.eq.s32.totalorder %s95, 0
      %s98 = sadd.s32 %s97, 1
      %s99 = scalar_select %p96, %s97, %s98
      %p102 = pneg %p96
      %p103 = scmp.eq.s32.totalorder %s12, 7
      %p104 = por %p102, %p103
      %p105 = scmp.ne.s32.totalorder %s97, %s100
      %p106 = scmp.eq.s32.totalorder %s12, 0
      %p107 = por %p105, %p106
      %p108 = scmp.ne.s32.totalorder %s97, %s100
      %p109 = scmp.eq.s32.totalorder %s17, 7
      %p110 = por %p108, %p109
      %p111 = scmp.ne.s32.totalorder %s100, %s101
      %p112 = scmp.eq.s32.totalorder %s17, 0
      %p113 = por %p111, %p112
      %p114 = scmp.ne.s32.totalorder %s100, %s101
      %p115 = scmp.eq.s32.totalorder %s18, 7
      %p116 = por %p114, %p115
      %p118 = scmp.ne.s32.totalorder %s101, %s117
      %p119 = scmp.eq.s32.totalorder %s18, 0
      %p120 = por %p118, %p119
      %s121 = ssub.s32 %s19, %s38
      %s122 = ssub.s32 %s20, %s34
      %s123 = sor.u32 %s121, %s122
      %p124 = scmp.eq.s32.totalorder %s123, 0
      %s126 = sadd.s32 %s125, 1
      %s127 = scalar_select %p124, %s125, %s126
      %p130 = pneg %p124
      %p131 = scmp.eq.s32.totalorder %s12, 7
      %p132 = por %p130, %p131
      %p133 = scmp.ne.s32.totalorder %s125, %s128
      %p134 = scmp.eq.s32.totalorder %s12, 0
      %p135 = por %p133, %p134
      %p136 = scmp.ne.s32.totalorder %s125, %s128
      %p137 = scmp.eq.s32.totalorder %s17, 7
      %p138 = por %p136, %p137
      %p139 = scmp.ne.s32.totalorder %s128, %s129
      %p140 = scmp.eq.s32.totalorder %s17, 0
      %p141 = por %p139, %p140
      %p142 = scmp.ne.s32.totalorder %s128, %s129
      %p143 = scmp.eq.s32.totalorder %s18, 7
      %p144 = por %p142, %p143
      %p146 = scmp.ne.s32.totalorder %s129, %s145
      %p147 = scmp.eq.s32.totalorder %s18, 0
      %p148 = por %p146, %p147
      %p149 = scmp.le.s32.totalorder 1, %s12
      %p150 = scmp.lt.s32.totalorder %s12, 9
      %p151 = pnand %p149, %p150
      %p152 = pneg %p151
      // Predicated region
      $region9: #{conv_im2col.1} parent=5 // pred_check
        _
      $region10: #{conv_im2col.1} parent=5 // pred_check_branch
        %154 = sbr.rel (%p151) target = $region12
      $region11: #{conv_im2col.1} parent=5 // pred_region
        %s155 = ssub.s32 %s12, 1
        // Predicated region
        $region13: #{conv_im2col.1} parent=11 // pred_check
          %p156 = pneg %p87
        $region14: #{conv_im2col.1} parent=11 // pred_check_branch
          %158 = sbr.rel (%p156) target = $region16
        $region15: #{conv_im2col.1} parent=11 // pred_region
          %s159 = smul.u32 19, %s24
          %p160 = scmp.lt.s32.totalorder %s159, 18
          %s161 = scalar_select %p160, %s159, 18
          %p162 = scmp.lt.s32.totalorder %s23, 0
          %s163 = scalar_select %p162, %s23, 0
          %s164 = sadd.s32 %s163, %s161
          %s165 = smul.addr %s164, 4
          %s166 = scalar_lea.vmem %s1, %s165
          %s167 = smul.u32 19, %s24
        $region16: #{conv_im2col.1} parent=11 // pred_fallthru
          _
        // Predicated region
        $region17: #{conv_im2col.1} parent=11 // pred_check
          %p168 = pneg %p113
        $region18: #{conv_im2col.1} parent=11 // pred_check_branch
          %170 = sbr.rel (%p168) target = $region20
        $region19: #{conv_im2col.1} parent=11 // pred_region
          %p171 = scmp.lt.s32.totalorder %s23, 0
          %s172 = scalar_select %p171, %s23, 0
          %s173 = scalar_lea.vmem %s2, %s172
        $region20: #{conv_im2col.1} parent=11 // pred_fallthru
          _
      $region12: #{conv_im2col.1} parent=5 // pred_fallthru
        _
      %p174 = scmp.lt.s32.totalorder %s12, 8
      // Predicated region
      $region21: #{conv_im2col.1} parent=5 // pred_check
        %p175 = pneg %p174
      $region22: #{conv_im2col.1} parent=5 // pred_check_branch
        %177 = sbr.rel (%p175) target = $region24
      $region23: #{conv_im2col.1} parent=5 // pred_region
        // Predicated region
        $region25: #{conv_im2col.1} parent=23 // pred_check
          %p178 = pneg %p53
        $region26: #{conv_im2col.1} parent=23 // pred_check_branch
          %180 = sbr.rel (%p178) target = $region28
        $region27: #{conv_im2col.1} parent=23 // pred_region
          %s181 = smul.u32 32, %s19
          %s182 = smul.u32 2, %s21
          %p183 = scmp.lt.s32.totalorder %s181, 255
          %s184 = scalar_select %p183, %s181, 255
          %p185 = scmp.lt.s32.totalorder %s182, 1
          %s186 = scalar_select %p185, %s182, 1
          %s187 = smul.addr %s184, 2
          %s188 = sadd.s32 %s186, %s187
          %s189 = smul.addr %s188, 4
          %s190 = scalar_lea.vmem %s0, %s189
          %s191 = smul.u32 32, %s19
          %s192 = smul.u32 2, %s21
        $region28: #{conv_im2col.1} parent=23 // pred_fallthru
          _
      $region24: #{conv_im2col.1} parent=5 // pred_fallthru
        _
      %p193 = scmp.le.s32.totalorder 1, %s12
      %p194 = scmp.lt.s32.totalorder %s12, 9
      %p195 = pnand %p193, %p194
      %p196 = pneg %p195
      // Predicated region
      $region29: #{conv_im2col.1} parent=5 // pred_check
        _
      $region30: #{conv_im2col.1} parent=5 // pred_check_branch
        %198 = sbr.rel (%p195) target = $region32
      $region31: #{conv_im2col.1} parent=5 // pred_region
        %s199 = ssub.s32 %s12, 1
        %s200 = smul.u32 32, %s22
        %s201 = smul.u32 2, %s24
        %p202 = scmp.lt.s32.totalorder %s200, 255
        %s203 = scalar_select %p202, %s200, 255
        %p204 = scmp.lt.s32.totalorder %s201, 1
        %s205 = scalar_select %p204, %s201, 1
        %s206 = smul.addr %s203, 2
        %s207 = sadd.s32 %s205, %s206
        %s208 = smul.addr %s207, 4
        %s209 = scalar_lea.vmem %s0, %s208
        %p210 = pneg %p59
        %p211 = pneg %p56
        %s212 = smul.u32 19, %s24
        %p213 = scmp.lt.s32.totalorder %s212, 18
        %s214 = scalar_select %p213, %s212, 18
        %p215 = scmp.lt.s32.totalorder %s23, 0
        %s216 = scalar_select %p215, %s23, 0
        %s217 = sadd.s32 %s216, %s214
        %s218 = smul.addr %s217, 4
        %s219 = scalar_lea.vmem %s1, %s218
        %p220 = pneg %p87
        %p221 = pneg %p84
        %p222 = scmp.lt.s32.totalorder %s23, 0
        %s223 = scalar_select %p222, %s23, 0
        %s224 = scalar_lea.vmem %s2, %s223
        %p225 = pneg %p113
        %p226 = pneg %p110
        %p227 = pneg %p141
        %p228 = pneg %p138
        %s229 = sand.u32 %s128, 1
        %s230 = scalar_lea.sflag [#allocation4], %s229
        %s231 = sand.u32 %s128, 1
        %s232 = smul.addr %s231, 128
        %s233 = scalar_lea.vmem [#allocation3], %s232
        %s234 = smul.u32 32, %s22
        %s235 = smul.u32 2, %s24
        %p236 = scmp.lt.s32.totalorder %s234, 255
        %s237 = scalar_select %p236, %s234, 255
        %p238 = scmp.lt.s32.totalorder %s235, 1
        %s239 = scalar_select %p238, %s235, 1
        %s240 = smul.addr %s237, 2
        %s241 = sadd.s32 %s239, %s240
        %s242 = smul.addr %s241, 4
        %s243 = scalar_lea.vmem %s0, %s242
        %s244 = smul.u32 32, %s22
        %s245 = smul.u32 2, %s24
        %s246 = smul.u32 19, %s24
        %p247 = scmp.lt.s32.totalorder %s246, 18
        %s248 = scalar_select %p247, %s246, 18
        %p249 = scmp.lt.s32.totalorder %s23, 0
        %s250 = scalar_select %p249, %s23, 0
        %s251 = sadd.s32 %s250, %s248
        %s252 = smul.addr %s251, 4
        %s253 = scalar_lea.vmem %s1, %s252
        %s254 = smul.u32 19, %s24
        %p255 = scmp.lt.s32.totalorder %s23, 0
        %s256 = scalar_select %p255, %s23, 0
        %s257 = scalar_lea.vmem %s2, %s256
        %s258 = smul.u32 32, %s22
        %p260 = scmp.eq.s32.totalorder %s24, 0
        // Predicated region
        $region33: #{conv_im2col.1} parent=31 // pred_check
          %p261 = pneg %p260
        $region34: #{conv_im2col.1} parent=31 // pred_check_branch
          %263 = sbr.rel (%p261) target = $region36
        $region35: #{conv_im2col.1} parent=31 // pred_region
          %264 = vst [vmem:[#allocation2] sm:$0xff] 0.0
          %265 = vst [vmem:[#allocation2 + $0x8] sm:$0xff] 0.0
          %266 = vst [vmem:[#allocation2 + $0x10] sm:$0xff] 0.0
          %267 = vst [vmem:[#allocation2 + $0x18] sm:$0xff] 0.0
          %268 = vst [vmem:[#allocation2 + $0x20] sm:$0xff] 0.0
          %269 = vst [vmem:[#allocation2 + $0x28] sm:$0xff] 0.0
          %270 = vst [vmem:[#allocation2 + $0x30] sm:$0xff] 0.0
          %271 = vst [vmem:[#allocation2 + $0x38] sm:$0xff] 0.0
          %272 = vst [vmem:[#allocation2 + $0x40] sm:$0xff] 0.0
          %273 = vst [vmem:[#allocation2 + $0x48] sm:$0xff] 0.0
          %274 = vst [vmem:[#allocation2 + $0x50] sm:$0xff] 0.0
          %275 = vst [vmem:[#allocation2 + $0x58] sm:$0xff] 0.0
          %276 = vst [vmem:[#allocation2 + $0x60] sm:$0xff] 0.0
          %277 = vst [vmem:[#allocation2 + $0x68] sm:$0xff] 0.0
          %278 = vst [vmem:[#allocation2 + $0x70] sm:$0xff] 0.0
          %279 = vst [vmem:[#allocation2 + $0x78] sm:$0xff] 0.0
          %280 = vst [vmem:[#allocation2 + $0x80] sm:$0xff] 0.0
          %281 = vst [vmem:[#allocation2 + $0x88] sm:$0xff] 0.0
          %282 = vst [vmem:[#allocation2 + $0x90] sm:$0xff] 0.0
          %283 = vst [vmem:[#allocation2 + $0x98] sm:$0xff] 0.0
          %284 = vst [vmem:[#allocation2 + $0xa0] sm:$0xff] 0.0
          %285 = vst [vmem:[#allocation2 + $0xa8] sm:$0xff] 0.0
          %286 = vst [vmem:[#allocation2 + $0xb0] sm:$0xff] 0.0
          %287 = vst [vmem:[#allocation2 + $0xb8] sm:$0xff] 0.0
          %288 = vst [vmem:[#allocation2 + $0xc0] sm:$0xff] 0.0
          %289 = vst [vmem:[#allocation2 + $0xc8] sm:$0xff] 0.0
          %290 = vst [vmem:[#allocation2 + $0xd0] sm:$0xff] 0.0
          %291 = vst [vmem:[#allocation2 + $0xd8] sm:$0xff] 0.0
          %292 = vst [vmem:[#allocation2 + $0xe0] sm:$0xff] 0.0
          %293 = vst [vmem:[#allocation2 + $0xe8] sm:$0xff] 0.0
          %294 = vst [vmem:[#allocation2 + $0xf0] sm:$0xff] 0.0
          %295 = vst [vmem:[#allocation2 + $0xf8] sm:$0xff] 0.0
        $region36: #{conv_im2col.1} parent=31 // pred_fallthru
          _
        %v296 = vld [vmem:[#allocation2] sm:$0xff]
        %v297 = vld [vmem:[#allocation2 + $0x8] sm:$0xff]
        %v298 = vld [vmem:[#allocation2 + $0x10] sm:$0xff]
        %v299 = vld [vmem:[#allocation2 + $0x18] sm:$0xff]
        %v300 = vld [vmem:[#allocation2 + $0x20] sm:$0xff]
        %v301 = vld [vmem:[#allocation2 + $0x28] sm:$0xff]
        %v302 = vld [vmem:[#allocation2 + $0x30] sm:$0xff]
        %v303 = vld [vmem:[#allocation2 + $0x38] sm:$0xff]
        %v304 = vld [vmem:[#allocation2 + $0x40] sm:$0xff]
        %v305 = vld [vmem:[#allocation2 + $0x48] sm:$0xff]
        %v306 = vld [vmem:[#allocation2 + $0x50] sm:$0xff]
        %v307 = vld [vmem:[#allocation2 + $0x58] sm:$0xff]
        %v308 = vld [vmem:[#allocation2 + $0x60] sm:$0xff]
        %v309 = vld [vmem:[#allocation2 + $0x68] sm:$0xff]
        %v310 = vld [vmem:[#allocation2 + $0x70] sm:$0xff]
        %v311 = vld [vmem:[#allocation2 + $0x78] sm:$0xff]
        %v312 = vld [vmem:[#allocation2 + $0x80] sm:$0xff]
        %v313 = vld [vmem:[#allocation2 + $0x88] sm:$0xff]
        %v314 = vld [vmem:[#allocation2 + $0x90] sm:$0xff]
        %v315 = vld [vmem:[#allocation2 + $0x98] sm:$0xff]
        %v316 = vld [vmem:[#allocation2 + $0xa0] sm:$0xff]
        %v317 = vld [vmem:[#allocation2 + $0xa8] sm:$0xff]
        %v318 = vld [vmem:[#allocation2 + $0xb0] sm:$0xff]
        %v319 = vld [vmem:[#allocation2 + $0xb8] sm:$0xff]
        %v320 = vld [vmem:[#allocation2 + $0xc0] sm:$0xff]
        %v321 = vld [vmem:[#allocation2 + $0xc8] sm:$0xff]
        %v322 = vld [vmem:[#allocation2 + $0xd0] sm:$0xff]
        %v323 = vld [vmem:[#allocation2 + $0xd8] sm:$0xff]
        %v324 = vld [vmem:[#allocation2 + $0xe0] sm:$0xff]
        %v325 = vld [vmem:[#allocation2 + $0xe8] sm:$0xff]
        %v326 = vld [vmem:[#allocation2 + $0xf0] sm:$0xff]
        %v327 = vld [vmem:[#allocation2 + $0xf8] sm:$0xff]
        %v328 = vld [vmem:[%s243] sm:$0xff]
        %v329 = vld [vmem:[%s243 + $0x8] sm:$0xff]
        %v330 = vld [vmem:[%s243 + $0x10] sm:$0xff]
        %v331 = vld [vmem:[%s243 + $0x18] sm:$0xff]
        %v332 = vld [vmem:[%s243 + $0x20] sm:$0xff]
        %v333 = vld [vmem:[%s243 + $0x28] sm:$0xff]
        %v334 = vld [vmem:[%s243 + $0x30] sm:$0xff]
        %v335 = vld [vmem:[%s243 + $0x38] sm:$0xff]
        %v336 = vld [vmem:[%s243 + $0x40] sm:$0xff]
        %v337 = vld [vmem:[%s243 + $0x48] sm:$0xff]
        %v338 = vld [vmem:[%s243 + $0x50] sm:$0xff]
        %v339 = vld [vmem:[%s243 + $0x58] sm:$0xff]
        %v340 = vld [vmem:[%s243 + $0x60] sm:$0xff]
        %v341 = vld [vmem:[%s243 + $0x68] sm:$0xff]
        %v342 = vld [vmem:[%s243 + $0x70] sm:$0xff]
        %v343 = vld [vmem:[%s243 + $0x78] sm:$0xff]
        %v344 = vld [vmem:[%s243 + $0x80] sm:$0xff]
        %v345 = vld [vmem:[%s243 + $0x88] sm:$0xff]
        %v346 = vld [vmem:[%s243 + $0x90] sm:$0xff]
        %v347 = vld [vmem:[%s243 + $0x98] sm:$0xff]
        %v348 = vld [vmem:[%s243 + $0xa0] sm:$0xff]
        %v349 = vld [vmem:[%s243 + $0xa8] sm:$0xff]
        %v350 = vld [vmem:[%s243 + $0xb0] sm:$0xff]
        %v351 = vld [vmem:[%s243 + $0xb8] sm:$0xff]
        %v352 = vld [vmem:[%s243 + $0xc0] sm:$0xff]
        %v353 = vld [vmem:[%s243 + $0xc8] sm:$0xff]
        %v354 = vld [vmem:[%s243 + $0xd0] sm:$0xff]
        %v355 = vld [vmem:[%s243 + $0xd8] sm:$0xff]
        %v356 = vld [vmem:[%s243 + $0xe0] sm:$0xff]
        %v357 = vld [vmem:[%s243 + $0xe8] sm:$0xff]
        %v358 = vld [vmem:[%s243 + $0xf0] sm:$0xff]
        %v359 = vld [vmem:[%s243 + $0xf8] sm:$0xff]
        %v360 = vld [vmem:[%s253] sm:$0xf]
        %v361 = vld [vmem:[%s253 + $0x4] sm:$0xf]
        %v362 = vld [vmem:[%s253 + $0x8] sm:$0xf]
        %v363 = vld [vmem:[%s253 + $0xc] sm:$0xf]
        %v364 = vld [vmem:[%s253 + $0x10] sm:$0xf]
        %v365 = vld [vmem:[%s253 + $0x14] sm:$0xf]
        %v366 = vld [vmem:[%s253 + $0x18] sm:$0xf]
        %v367 = vld [vmem:[%s253 + $0x1c] sm:$0xf]
        %v368 = vld [vmem:[%s253 + $0x20] sm:$0xf]
        %v369 = vld [vmem:[%s253 + $0x24] sm:$0xf]
        %v370 = vld [vmem:[%s253 + $0x28] sm:$0xf]
        %v371 = vld [vmem:[%s253 + $0x2c] sm:$0xf]
        %v372 = vld [vmem:[%s253 + $0x30] sm:$0xf]
        %v373 = vld [vmem:[%s253 + $0x34] sm:$0xf]
        %v374 = vld [vmem:[%s253 + $0x38] sm:$0xf]
        %v375 = vld [vmem:[%s253 + $0x3c] sm:$0xf]
        %v376 = vld [vmem:[%s253 + $0x40] sm:$0xf]
        %v377 = vld [vmem:[%s253 + $0x44] sm:$0xf]
        %v378 = vld [vmem:[%s253 + $0x48] sm:$0x3]
        %v411 = vunpack.c.l.b16 %v328
        %v412 = vunpack.c.h.b16 %v328
        %v413 = vunpack.c.l.b16 %v329
        %v414 = vunpack.c.h.b16 %v329
        %v415 = vunpack.c.l.b16 %v330
        %v416 = vunpack.c.h.b16 %v330
        %v417 = vunpack.c.l.b16 %v331
        %v418 = vunpack.c.h.b16 %v331
        %v419 = vunpack.c.l.b16 %v332
        %v420 = vunpack.c.h.b16 %v332
        %v421 = vunpack.c.l.b16 %v333
        %v422 = vunpack.c.h.b16 %v333
        %v423 = vunpack.c.l.b16 %v334
        %v424 = vunpack.c.h.b16 %v334
        %v425 = vunpack.c.l.b16 %v335
        %v426 = vunpack.c.h.b16 %v335
        %v427 = vunpack.c.l.b16 %v336
        %v428 = vunpack.c.h.b16 %v336
        %v429 = vunpack.c.l.b16 %v337
        %v430 = vunpack.c.h.b16 %v337
        %v431 = vunpack.c.l.b16 %v338
        %v432 = vunpack.c.h.b16 %v338
        %v433 = vunpack.c.l.b16 %v339
        %v434 = vunpack.c.h.b16 %v339
        %v435 = vunpack.c.l.b16 %v340
        %v436 = vunpack.c.h.b16 %v340
        %v437 = vunpack.c.l.b16 %v341
        %v438 = vunpack.c.h.b16 %v341
        %v439 = vunpack.c.l.b16 %v342
        %v440 = vunpack.c.h.b16 %v342
        %v441 = vunpack.c.l.b16 %v343
        %v442 = vunpack.c.h.b16 %v343
        %v443 = vunpack.c.l.b16 %v344
        %v444 = vunpack.c.h.b16 %v344
        %v445 = vunpack.c.l.b16 %v345
        %v446 = vunpack.c.h.b16 %v345
        %v447 = vunpack.c.l.b16 %v346
        %v448 = vunpack.c.h.b16 %v346
        %v449 = vunpack.c.l.b16 %v347
        %v450 = vunpack.c.h.b16 %v347
        %v451 = vunpack.c.l.b16 %v348
        %v452 = vunpack.c.h.b16 %v348
        %v453 = vunpack.c.l.b16 %v349
        %v454 = vunpack.c.h.b16 %v349
        %v455 = vunpack.c.l.b16 %v350
        %v456 = vunpack.c.h.b16 %v350
        %v457 = vunpack.c.l.b16 %v351
        %v458 = vunpack.c.h.b16 %v351
        %v459 = vunpack.c.l.b16 %v352
        %v460 = vunpack.c.h.b16 %v352
        %v461 = vunpack.c.l.b16 %v353
        %v462 = vunpack.c.h.b16 %v353
        %v463 = vunpack.c.l.b16 %v354
        %v464 = vunpack.c.h.b16 %v354
        %v465 = vunpack.c.l.b16 %v355
        %v466 = vunpack.c.h.b16 %v355
        %v467 = vunpack.c.l.b16 %v356
        %v468 = vunpack.c.h.b16 %v356
        %v469 = vunpack.c.l.b16 %v357
        %v470 = vunpack.c.h.b16 %v357
        %v471 = vunpack.c.l.b16 %v358
        %v472 = vunpack.c.h.b16 %v358
        %v473 = vunpack.c.l.b16 %v359
        %v474 = vunpack.c.h.b16 %v359
        %v475 = vpack.c.b16 %v413, %v411
        %v476 = vpack.c.b16 %v414, %v412
        %v477 = vpack.c.b16 %v417, %v415
        %v478 = vpack.c.b16 %v418, %v416
        %v479 = vpack.c.b16 %v421, %v419
        %v480 = vpack.c.b16 %v422, %v420
        %v481 = vpack.c.b16 %v425, %v423
        %v482 = vpack.c.b16 %v426, %v424
        %v483 = vpack.c.b16 %v429, %v427
        %v484 = vpack.c.b16 %v430, %v428
        %v485 = vpack.c.b16 %v433, %v431
        %v486 = vpack.c.b16 %v434, %v432
        %v487 = vpack.c.b16 %v437, %v435
        %v488 = vpack.c.b16 %v438, %v436
        %v489 = vpack.c.b16 %v441, %v439
        %v490 = vpack.c.b16 %v442, %v440
        %v491 = vpack.c.b16 %v445, %v443
        %v492 = vpack.c.b16 %v446, %v444
        %v493 = vpack.c.b16 %v449, %v447
        %v494 = vpack.c.b16 %v450, %v448
        %v495 = vpack.c.b16 %v453, %v451
        %v496 = vpack.c.b16 %v454, %v452
        %v497 = vpack.c.b16 %v457, %v455
        %v498 = vpack.c.b16 %v458, %v456
        %v499 = vpack.c.b16 %v461, %v459
        %v500 = vpack.c.b16 %v462, %v460
        %v501 = vpack.c.b16 %v465, %v463
        %v502 = vpack.c.b16 %v466, %v464
        %v503 = vpack.c.b16 %v469, %v467
        %v504 = vpack.c.b16 %v470, %v468
        %v505 = vpack.c.b16 %v473, %v471
        %v506 = vpack.c.b16 %v474, %v472
        %v542 = vunpack.c.l.b16 %v360
        %v543 = vunpack.c.l.b16 %v361
        %v544 = vunpack.c.l.b16 %v362
        %v545 = vunpack.c.l.b16 %v363
        %v546 = vunpack.c.l.b16 %v364
        %v547 = vunpack.c.l.b16 %v365
        %v548 = vunpack.c.l.b16 %v366
        %v549 = vunpack.c.l.b16 %v367
        %v550 = vunpack.c.l.b16 %v368
        %v551 = vunpack.c.l.b16 %v369
        %v552 = vunpack.c.l.b16 %v370
        %v553 = vunpack.c.l.b16 %v371
        %v554 = vunpack.c.l.b16 %v372
        %v555 = vunpack.c.l.b16 %v373
        %v556 = vunpack.c.l.b16 %v374
        %v557 = vunpack.c.l.b16 %v375
        %v558 = vunpack.c.l.b16 %v376
        %v559 = vunpack.c.l.b16 %v377
        %v560 = vunpack.c.l.b16 %v378
        %v561 = vpack.c.b16 %v543, %v542
        %v562 = vpack.c.b16 %v545, %v544
        %v563 = vpack.c.b16 %v547, %v546
        %v564 = vpack.c.b16 %v549, %v548
        %v565 = vpack.c.b16 %v551, %v550
        %v566 = vpack.c.b16 %v553, %v552
        %v567 = vpack.c.b16 %v555, %v554
        %v568 = vpack.c.b16 %v557, %v556
        %v569 = vpack.c.b16 %v559, %v558
        %v570 = vpack.c.b16 %v560, %v560
        %vm580 = vcmask 154624
        %v582 = vsel %vm580, %v476, 0
        %v585 = vsel %vm580, %v478, 0
        %v588 = vsel %vm580, %v480, 0
        %v591 = vsel %vm580, %v482, 0
        %v594 = vsel %vm580, %v484, 0
        %v597 = vsel %vm580, %v486, 0
        %v600 = vsel %vm580, %v488, 0
        %v603 = vsel %vm580, %v490, 0
        %v606 = vsel %vm580, %v492, 0
        %v609 = vsel %vm580, %v494, 0
        %v612 = vsel %vm580, %v496, 0
        %v615 = vsel %vm580, %v498, 0
        %v618 = vsel %vm580, %v500, 0
        %v621 = vsel %vm580, %v502, 0
        %v624 = vsel %vm580, %v504, 0
        %v627 = vsel %vm580, %v506, 0
        %vm629 = vcmask 1040384
        %vm630 = vcmask 1041408
        %v631 = vsel %vm629, 4294967295, 65535
        %v632 = vsel %vm630, %v631, 0
        %v634 = vand.u32 %v570, %v632
        %636 = vmatprep.subr.bf16.mxu0 0
        %637 = vmatpush1.bf16.msra.mxu0 %v561
        %638 = vmatprep.subr.bf16.mxu0 0
        %639 = vmatpush1.bf16.msra.mxu0 %v562
        %640 = vmatprep.subr.bf16.mxu0 0
        %641 = vmatpush1.bf16.msra.mxu0 %v563
        %642 = vmatprep.subr.bf16.mxu0 0
        %643 = vmatpush1.bf16.msra.mxu0 %v564
        %644 = vmatprep.subr.bf16.mxu0 0
        %645 = vmatpush1.bf16.msra.mxu0 %v565
        %646 = vmatprep.subr.bf16.mxu0 0
        %647 = vmatpush1.bf16.msra.mxu0 %v566
        %648 = vmatprep.subr.bf16.mxu0 0
        %649 = vmatpush1.bf16.msra.mxu0 %v567
        %650 = vmatprep.subr.bf16.mxu0 0
        %651 = vmatpush1.bf16.msra.mxu0 %v568
        %652 = vmatprep.subr.bf16.mxu0 0
        %653 = vmatpush1.bf16.msra.mxu0 %v569
        %654 = vmatprep.subr.bf16.mxu0 0
        %655 = vmatpush1.bf16.msra.mxu0 %v634
        %656 = vmatprep.subr.bf16.mxu0 0
        %657 = vmatpush1.bf16.msra.mxu0 0
        %658 = vmatprep.subr.bf16.mxu0 0
        %659 = vmatpush1.bf16.msra.mxu0 0
        %660 = vmatprep.subr.bf16.mxu0 0
        %661 = vmatpush1.bf16.msra.mxu0 0
        %662 = vmatprep.subr.bf16.mxu0 0
        %663 = vmatpush1.bf16.msra.mxu0 0
        %664 = vmatprep.subr.bf16.mxu0 0
        %665 = vmatpush1.bf16.msra.mxu0 0
        %666 = vmatprep.subr.bf16.mxu0 0
        %667 = vmatpush1.bf16.msra.mxu0 0
        %668 = vmatprep.mubr.bf16.mxu0 %v582
        %669 = vmatmul.mubr.bf16.gmra.mrb[0].mxu0 %v475
        %v670 = vpop.f32.mrb[0].mxu0
        %v671 = vadd.f32 0.0, %v670
        %v672 = vpop.f32.mrb[0].mxu0
        %v673 = vpop.f32.mrb[0].mxu0
        %v674 = vadd.f32 0.0, %v673
        %v675 = vpop.f32.mrb[0].mxu0
        %676 = vmatprep.mubr.bf16.mxu0 %v585
        %677 = vmatmul.mubr.bf16.gmra.mrb[0].mxu0 %v477
        %v678 = vpop.f32.mrb[0].mxu0
        %v679 = vadd.f32 0.0, %v678
        %v680 = vpop.f32.mrb[0].mxu0
        %v681 = vpop.f32.mrb[0].mxu0
        %v682 = vadd.f32 0.0, %v681
        %v683 = vpop.f32.mrb[0].mxu0
        %684 = vmatprep.mubr.bf16.mxu0 %v588
        %685 = vmatmul.mubr.bf16.gmra.mrb[0].mxu0 %v479
        %v686 = vpop.f32.mrb[0].mxu0
        %v687 = vadd.f32 0.0, %v686
        %v688 = vpop.f32.mrb[0].mxu0
        %v689 = vpop.f32.mrb[0].mxu0
        %v690 = vadd.f32 0.0, %v689
        %v691 = vpop.f32.mrb[0].mxu0
        %692 = vmatprep.mubr.bf16.mxu0 %v591
        %693 = vmatmul.mubr.bf16.gmra.mrb[0].mxu0 %v481
        %v694 = vpop.f32.mrb[0].mxu0
        %v695 = vadd.f32 0.0, %v694
        %v696 = vpop.f32.mrb[0].mxu0
        %v697 = vpop.f32.mrb[0].mxu0
        %v698 = vadd.f32 0.0, %v697
        %v699 = vpop.f32.mrb[0].mxu0
        %700 = vmatprep.mubr.bf16.mxu0 %v594
        %701 = vmatmul.mubr.bf16.gmra.mrb[0].mxu0 %v483
        %v702 = vpop.f32.mrb[0].mxu0
        %v703 = vadd.f32 0.0, %v702
        %v704 = vpop.f32.mrb[0].mxu0
        %v705 = vpop.f32.mrb[0].mxu0
        %v706 = vadd.f32 0.0, %v705
        %v707 = vpop.f32.mrb[0].mxu0
        %708 = vmatprep.mubr.bf16.mxu0 %v597
        %709 = vmatmul.mubr.bf16.gmra.mrb[0].mxu0 %v485
        %v710 = vpop.f32.mrb[0].mxu0
        %v711 = vadd.f32 0.0, %v710
        %v712 = vpop.f32.mrb[0].mxu0
        %v713 = vpop.f32.mrb[0].mxu0
        %v714 = vadd.f32 0.0, %v713
        %v715 = vpop.f32.mrb[0].mxu0
        %716 = vmatprep.mubr.bf16.mxu0 %v600
        %717 = vmatmul.mubr.bf16.gmra.mrb[0].mxu0 %v487
        %v718 = vpop.f32.mrb[0].mxu0
        %v719 = vadd.f32 0.0, %v718
        %v720 = vpop.f32.mrb[0].mxu0
        %v721 = vpop.f32.mrb[0].mxu0
        %v722 = vadd.f32 0.0, %v721
        %v723 = vpop.f32.mrb[0].mxu0
        %724 = vmatprep.mubr.bf16.mxu0 %v603
        %725 = vmatmul.mubr.bf16.gmra.mrb[0].mxu0 %v489
        %v726 = vpop.f32.mrb[0].mxu0
        %v727 = vadd.f32 0.0, %v726
        %v728 = vpop.f32.mrb[0].mxu0
        %v729 = vpop.f32.mrb[0].mxu0
        %v730 = vadd.f32 0.0, %v729
        %v731 = vpop.f32.mrb[0].mxu0
        %732 = vmatprep.mubr.bf16.mxu0 %v606
        %733 = vmatmul.mubr.bf16.gmra.mrb[0].mxu0 %v491
        %v734 = vpop.f32.mrb[0].mxu0
        %v735 = vadd.f32 0.0, %v734
        %v736 = vpop.f32.mrb[0].mxu0
        %v737 = vpop.f32.mrb[0].mxu0
        %v738 = vadd.f32 0.0, %v737
        %v739 = vpop.f32.mrb[0].mxu0
        %740 = vmatprep.mubr.bf16.mxu0 %v609
        %741 = vmatmul.mubr.bf16.gmra.mrb[0].mxu0 %v493
        %v742 = vpop.f32.mrb[0].mxu0
        %v743 = vadd.f32 0.0, %v742
        %v744 = vpop.f32.mrb[0].mxu0
        %v745 = vpop.f32.mrb[0].mxu0
        %v746 = vadd.f32 0.0, %v745
        %v747 = vpop.f32.mrb[0].mxu0
        %748 = vmatprep.mubr.bf16.mxu0 %v612
        %749 = vmatmul.mubr.bf16.gmra.mrb[0].mxu0 %v495
        %v750 = vpop.f32.mrb[0].mxu0
        %v751 = vadd.f32 0.0, %v750
        %v752 = vpop.f32.mrb[0].mxu0
        %v753 = vpop.f32.mrb[0].mxu0
        %v754 = vadd.f32 0.0, %v753
        %v755 = vpop.f32.mrb[0].mxu0
        %756 = vmatprep.mubr.bf16.mxu0 %v615
        %757 = vmatmul.mubr.bf16.gmra.mrb[0].mxu0 %v497
        %v758 = vpop.f32.mrb[0].mxu0
        %v759 = vadd.f32 0.0, %v758
        %v760 = vpop.f32.mrb[0].mxu0
        %v761 = vpop.f32.mrb[0].mxu0
        %v762 = vadd.f32 0.0, %v761
        %v763 = vpop.f32.mrb[0].mxu0
        %764 = vmatprep.mubr.bf16.mxu0 %v618
        %765 = vmatmul.mubr.bf16.gmra.mrb[0].mxu0 %v499
        %v766 = vpop.f32.mrb[0].mxu0
        %v767 = vadd.f32 0.0, %v766
        %v768 = vpop.f32.mrb[0].mxu0
        %v769 = vpop.f32.mrb[0].mxu0
        %v770 = vadd.f32 0.0, %v769
        %v771 = vpop.f32.mrb[0].mxu0
        %772 = vmatprep.mubr.bf16.mxu0 %v621
        %773 = vmatmul.mubr.bf16.gmra.mrb[0].mxu0 %v501
        %v774 = vpop.f32.mrb[0].mxu0
        %v775 = vadd.f32 0.0, %v774
        %v776 = vpop.f32.mrb[0].mxu0
        %v777 = vpop.f32.mrb[0].mxu0
        %v778 = vadd.f32 0.0, %v777
        %v779 = vpop.f32.mrb[0].mxu0
        %780 = vmatprep.mubr.bf16.mxu0 %v624
        %781 = vmatmul.mubr.bf16.gmra.mrb[0].mxu0 %v503
        %v782 = vpop.f32.mrb[0].mxu0
        %v783 = vadd.f32 0.0, %v782
        %v784 = vpop.f32.mrb[0].mxu0
        %v785 = vpop.f32.mrb[0].mxu0
        %v786 = vadd.f32 0.0, %v785
        %v787 = vpop.f32.mrb[0].mxu0
        %788 = vmatprep.mubr.bf16.mxu0 %v627
        %789 = vmatmul.mubr.bf16.gmra.mrb[0].mxu0 %v505
        %v790 = vpop.f32.mrb[0].mxu0
        %v791 = vadd.f32 0.0, %v790
        %v792 = vpop.f32.mrb[0].mxu0
        %v793 = vpop.f32.mrb[0].mxu0
        %v794 = vadd.f32 0.0, %v793
        %v795 = vpop.f32.mrb[0].mxu0
        %796 = vdwg.mxu0
        %v797 = vadd.f32 %v296, %v671
        %v798 = vadd.f32 %v297, %v674
        %v799 = vadd.f32 %v298, %v679
        %v800 = vadd.f32 %v299, %v682
        %v801 = vadd.f32 %v300, %v687
        %v802 = vadd.f32 %v301, %v690
        %v803 = vadd.f32 %v302, %v695
        %v804 = vadd.f32 %v303, %v698
        %v805 = vadd.f32 %v304, %v703
        %v806 = vadd.f32 %v305, %v706
        %v807 = vadd.f32 %v306, %v711
        %v808 = vadd.f32 %v307, %v714
        %v809 = vadd.f32 %v308, %v719
        %v810 = vadd.f32 %v309, %v722
        %v811 = vadd.f32 %v310, %v727
        %v812 = vadd.f32 %v311, %v730
        %v813 = vadd.f32 %v312, %v735
        %v814 = vadd.f32 %v313, %v738
        %v815 = vadd.f32 %v314, %v743
        %v816 = vadd.f32 %v315, %v746
        %v817 = vadd.f32 %v316, %v751
        %v818 = vadd.f32 %v317, %v754
        %v819 = vadd.f32 %v318, %v759
        %v820 = vadd.f32 %v319, %v762
        %v821 = vadd.f32 %v320, %v767
        %v822 = vadd.f32 %v321, %v770
        %v823 = vadd.f32 %v322, %v775
        %v824 = vadd.f32 %v323, %v778
        %v825 = vadd.f32 %v324, %v783
        %v826 = vadd.f32 %v325, %v786
        %v827 = vadd.f32 %v326, %v791
        %v828 = vadd.f32 %v327, %v794
        %829 = vst [vmem:[#allocation2] sm:$0xff] %v797
        %830 = vst [vmem:[#allocation2 + $0x8] sm:$0xff] %v798
        %831 = vst [vmem:[#allocation2 + $0x10] sm:$0xff] %v799
        %832 = vst [vmem:[#allocation2 + $0x18] sm:$0xff] %v800
        %833 = vst [vmem:[#allocation2 + $0x20] sm:$0xff] %v801
        %834 = vst [vmem:[#allocation2 + $0x28] sm:$0xff] %v802
        %835 = vst [vmem:[#allocation2 + $0x30] sm:$0xff] %v803
        %836 = vst [vmem:[#allocation2 + $0x38] sm:$0xff] %v804
        %837 = vst [vmem:[#allocation2 + $0x40] sm:$0xff] %v805
        %838 = vst [vmem:[#allocation2 + $0x48] sm:$0xff] %v806
        %839 = vst [vmem:[#allocation2 + $0x50] sm:$0xff] %v807
        %840 = vst [vmem:[#allocation2 + $0x58] sm:$0xff] %v808
        %841 = vst [vmem:[#allocation2 + $0x60] sm:$0xff] %v809
        %842 = vst [vmem:[#allocation2 + $0x68] sm:$0xff] %v810
        %843 = vst [vmem:[#allocation2 + $0x70] sm:$0xff] %v811
        %844 = vst [vmem:[#allocation2 + $0x78] sm:$0xff] %v812
        %845 = vst [vmem:[#allocation2 + $0x80] sm:$0xff] %v813
        %846 = vst [vmem:[#allocation2 + $0x88] sm:$0xff] %v814
        %847 = vst [vmem:[#allocation2 + $0x90] sm:$0xff] %v815
        %848 = vst [vmem:[#allocation2 + $0x98] sm:$0xff] %v816
        %849 = vst [vmem:[#allocation2 + $0xa0] sm:$0xff] %v817
        %850 = vst [vmem:[#allocation2 + $0xa8] sm:$0xff] %v818
        %851 = vst [vmem:[#allocation2 + $0xb0] sm:$0xff] %v819
        %852 = vst [vmem:[#allocation2 + $0xb8] sm:$0xff] %v820
        %853 = vst [vmem:[#allocation2 + $0xc0] sm:$0xff] %v821
        %854 = vst [vmem:[#allocation2 + $0xc8] sm:$0xff] %v822
        %855 = vst [vmem:[#allocation2 + $0xd0] sm:$0xff] %v823
        %856 = vst [vmem:[#allocation2 + $0xd8] sm:$0xff] %v824
        %857 = vst [vmem:[#allocation2 + $0xe0] sm:$0xff] %v825
        %858 = vst [vmem:[#allocation2 + $0xe8] sm:$0xff] %v826
        %859 = vst [vmem:[#allocation2 + $0xf0] sm:$0xff] %v827
        %860 = vst [vmem:[#allocation2 + $0xf8] sm:$0xff] %v828
        // Predicated region
        $region37: #{conv_im2col.1} parent=31 // pred_check
          %p861 = pneg %p260
        $region38: #{conv_im2col.1} parent=31 // pred_check_branch
          %863 = sbr.rel (%p861) target = $region40
        $region39: #{conv_im2col.1} parent=31 // pred_region
          %v864 = vld [vmem:[#allocation2] sm:$0xff]
          %v865 = vld [vmem:[#allocation2 + $0x8] sm:$0xff]
          %v866 = vld [vmem:[#allocation2 + $0x10] sm:$0xff]
          %v867 = vld [vmem:[#allocation2 + $0x18] sm:$0xff]
          %v868 = vld [vmem:[#allocation2 + $0x20] sm:$0xff]
          %v869 = vld [vmem:[#allocation2 + $0x28] sm:$0xff]
          %v870 = vld [vmem:[#allocation2 + $0x30] sm:$0xff]
          %v871 = vld [vmem:[#allocation2 + $0x38] sm:$0xff]
          %v872 = vld [vmem:[#allocation2 + $0x40] sm:$0xff]
          %v873 = vld [vmem:[#allocation2 + $0x48] sm:$0xff]
          %v874 = vld [vmem:[#allocation2 + $0x50] sm:$0xff]
          %v875 = vld [vmem:[#allocation2 + $0x58] sm:$0xff]
          %v876 = vld [vmem:[#allocation2 + $0x60] sm:$0xff]
          %v877 = vld [vmem:[#allocation2 + $0x68] sm:$0xff]
          %v878 = vld [vmem:[#allocation2 + $0x70] sm:$0xff]
          %v879 = vld [vmem:[#allocation2 + $0x78] sm:$0xff]
          %v880 = vld [vmem:[#allocation2 + $0x80] sm:$0xff]
          %v881 = vld [vmem:[#allocation2 + $0x88] sm:$0xff]
          %v882 = vld [vmem:[#allocation2 + $0x90] sm:$0xff]
          %v883 = vld [vmem:[#allocation2 + $0x98] sm:$0xff]
          %v884 = vld [vmem:[#allocation2 + $0xa0] sm:$0xff]
          %v885 = vld [vmem:[#allocation2 + $0xa8] sm:$0xff]
          %v886 = vld [vmem:[#allocation2 + $0xb0] sm:$0xff]
          %v887 = vld [vmem:[#allocation2 + $0xb8] sm:$0xff]
          %v888 = vld [vmem:[#allocation2 + $0xc0] sm:$0xff]
          %v889 = vld [vmem:[#allocation2 + $0xc8] sm:$0xff]
          %v890 = vld [vmem:[#allocation2 + $0xd0] sm:$0xff]
          %v891 = vld [vmem:[#allocation2 + $0xd8] sm:$0xff]
          %v892 = vld [vmem:[#allocation2 + $0xe0] sm:$0xff]
          %v893 = vld [vmem:[#allocation2 + $0xe8] sm:$0xff]
          %v894 = vld [vmem:[#allocation2 + $0xf0] sm:$0xff]
          %v895 = vld [vmem:[#allocation2 + $0xf8] sm:$0xff]
          %v896 = vld [vmem:[%s257] sm:$0x1]
          %v898 = vlaneseq
          %v899 = vshrl.u32 %v898, 7
          %v900 = vsub.s32 0, %v899
          %v901 = vrot.slane %v896, %v900
          %v903 = vadd.f32 %v864, %v901
          %v904 = vadd.f32 %v865, %v901
          %v905 = vadd.f32 %v866, %v901
          %v906 = vadd.f32 %v867, %v901
          %v907 = vadd.f32 %v868, %v901
          %v908 = vadd.f32 %v869, %v901
          %v909 = vadd.f32 %v870, %v901
          %v910 = vadd.f32 %v871, %v901
          %v911 = vadd.f32 %v872, %v901
          %v912 = vadd.f32 %v873, %v901
          %v913 = vadd.f32 %v874, %v901
          %v914 = vadd.f32 %v875, %v901
          %v915 = vadd.f32 %v876, %v901
          %v916 = vadd.f32 %v877, %v901
          %v917 = vadd.f32 %v878, %v901
          %v918 = vadd.f32 %v879, %v901
          %v919 = vadd.f32 %v880, %v901
          %v920 = vadd.f32 %v881, %v901
          %v921 = vadd.f32 %v882, %v901
          %v922 = vadd.f32 %v883, %v901
          %v923 = vadd.f32 %v884, %v901
          %v924 = vadd.f32 %v885, %v901
          %v925 = vadd.f32 %v886, %v901
          %v926 = vadd.f32 %v887, %v901
          %v927 = vadd.f32 %v888, %v901
          %v928 = vadd.f32 %v889, %v901
          %v929 = vadd.f32 %v890, %v901
          %v930 = vadd.f32 %v891, %v901
          %v931 = vadd.f32 %v892, %v901
          %v932 = vadd.f32 %v893, %v901
          %v933 = vadd.f32 %v894, %v901
          %v934 = vadd.f32 %v895, %v901
          %v935 = vmax.f32 %v903, 0.0
          %v936 = vmax.f32 %v904, 0.0
          %v937 = vmax.f32 %v905, 0.0
          %v938 = vmax.f32 %v906, 0.0
          %v939 = vmax.f32 %v907, 0.0
          %v940 = vmax.f32 %v908, 0.0
          %v941 = vmax.f32 %v909, 0.0
          %v942 = vmax.f32 %v910, 0.0
          %v943 = vmax.f32 %v911, 0.0
          %v944 = vmax.f32 %v912, 0.0
          %v945 = vmax.f32 %v913, 0.0
          %v946 = vmax.f32 %v914, 0.0
          %v947 = vmax.f32 %v915, 0.0
          %v948 = vmax.f32 %v916, 0.0
          %v949 = vmax.f32 %v917, 0.0
          %v950 = vmax.f32 %v918, 0.0
          %v951 = vmax.f32 %v919, 0.0
          %v952 = vmax.f32 %v920, 0.0
          %v953 = vmax.f32 %v921, 0.0
          %v954 = vmax.f32 %v922, 0.0
          %v955 = vmax.f32 %v923, 0.0
          %v956 = vmax.f32 %v924, 0.0
          %v957 = vmax.f32 %v925, 0.0
          %v958 = vmax.f32 %v926, 0.0
          %v959 = vmax.f32 %v927, 0.0
          %v960 = vmax.f32 %v928, 0.0
          %v961 = vmax.f32 %v929, 0.0
          %v962 = vmax.f32 %v930, 0.0
          %v963 = vmax.f32 %v931, 0.0
          %v964 = vmax.f32 %v932, 0.0
          %v965 = vmax.f32 %v933, 0.0
          %v966 = vmax.f32 %v934, 0.0
          %v967 = vpack.c.bf16 %v936, %v935
          %v968 = vpack.c.bf16 %v938, %v937
          %v969 = vpack.c.bf16 %v940, %v939
          %v970 = vpack.c.bf16 %v942, %v941
          %v971 = vpack.c.bf16 %v944, %v943
          %v972 = vpack.c.bf16 %v946, %v945
          %v973 = vpack.c.bf16 %v948, %v947
          %v974 = vpack.c.bf16 %v950, %v949
          %v975 = vpack.c.bf16 %v952, %v951
          %v976 = vpack.c.bf16 %v954, %v953
          %v977 = vpack.c.bf16 %v956, %v955
          %v978 = vpack.c.bf16 %v958, %v957
          %v979 = vpack.c.bf16 %v960, %v959
          %v980 = vpack.c.bf16 %v962, %v961
          %v981 = vpack.c.bf16 %v964, %v963
          %v982 = vpack.c.bf16 %v966, %v965
          %v999 = vunpack.c.l.b16 %v967
          %v1000 = vunpack.c.h.b16 %v967
          %v1001 = vunpack.c.l.b16 %v968
          %v1002 = vunpack.c.h.b16 %v968
          %v1003 = vunpack.c.l.b16 %v969
          %v1004 = vunpack.c.h.b16 %v969
          %v1005 = vunpack.c.l.b16 %v970
          %v1006 = vunpack.c.h.b16 %v970
          %v1007 = vunpack.c.l.b16 %v971
          %v1008 = vunpack.c.h.b16 %v971
          %v1009 = vunpack.c.l.b16 %v972
          %v1010 = vunpack.c.h.b16 %v972
          %v1011 = vunpack.c.l.b16 %v973
          %v1012 = vunpack.c.h.b16 %v973
          %v1013 = vunpack.c.l.b16 %v974
          %v1014 = vunpack.c.h.b16 %v974
          %v1015 = vunpack.c.l.b16 %v975
          %v1016 = vunpack.c.h.b16 %v975
          %v1017 = vunpack.c.l.b16 %v976
          %v1018 = vunpack.c.h.b16 %v976
          %v1019 = vunpack.c.l.b16 %v977
          %v1020 = vunpack.c.h.b16 %v977
          %v1021 = vunpack.c.l.b16 %v978
          %v1022 = vunpack.c.h.b16 %v978
          %v1023 = vunpack.c.l.b16 %v979
          %v1024 = vunpack.c.h.b16 %v979
          %v1025 = vunpack.c.l.b16 %v980
          %v1026 = vunpack.c.h.b16 %v980
          %v1027 = vunpack.c.l.b16 %v981
          %v1028 = vunpack.c.h.b16 %v981
          %v1029 = vunpack.c.l.b16 %v982
          %v1030 = vunpack.c.h.b16 %v982
          %v1031 = vpack.c.b16 %v999, %v999
          %v1032 = vpack.c.b16 %v1000, %v1000
          %v1033 = vpack.c.b16 %v1001, %v1001
          %v1034 = vpack.c.b16 %v1002, %v1002
          %v1035 = vpack.c.b16 %v1003, %v1003
          %v1036 = vpack.c.b16 %v1004, %v1004
          %v1037 = vpack.c.b16 %v1005, %v1005
          %v1038 = vpack.c.b16 %v1006, %v1006
          %v1039 = vpack.c.b16 %v1007, %v1007
          %v1040 = vpack.c.b16 %v1008, %v1008
          %v1041 = vpack.c.b16 %v1009, %v1009
          %v1042 = vpack.c.b16 %v1010, %v1010
          %v1043 = vpack.c.b16 %v1011, %v1011
          %v1044 = vpack.c.b16 %v1012, %v1012
          %v1045 = vpack.c.b16 %v1013, %v1013
          %v1046 = vpack.c.b16 %v1014, %v1014
          %v1047 = vpack.c.b16 %v1015, %v1015
          %v1048 = vpack.c.b16 %v1016, %v1016
          %v1049 = vpack.c.b16 %v1017, %v1017
          %v1050 = vpack.c.b16 %v1018, %v1018
          %v1051 = vpack.c.b16 %v1019, %v1019
          %v1052 = vpack.c.b16 %v1020, %v1020
          %v1053 = vpack.c.b16 %v1021, %v1021
          %v1054 = vpack.c.b16 %v1022, %v1022
          %v1055 = vpack.c.b16 %v1023, %v1023
          %v1056 = vpack.c.b16 %v1024, %v1024
          %v1057 = vpack.c.b16 %v1025, %v1025
          %v1058 = vpack.c.b16 %v1026, %v1026
          %v1059 = vpack.c.b16 %v1027, %v1027
          %v1060 = vpack.c.b16 %v1028, %v1028
          %v1061 = vpack.c.b16 %v1029, %v1029
          %v1062 = vpack.c.b16 %v1030, %v1030
          %1095 = vst [vmem:[%s233] sm:$0xf] %v1031
          %1096 = vst [vmem:[%s233 + $0x4] sm:$0xf] %v1032
          %1097 = vst [vmem:[%s233 + $0x8] sm:$0xf] %v1033
          %1098 = vst [vmem:[%s233 + $0xc] sm:$0xf] %v1034
          %1099 = vst [vmem:[%s233 + $0x10] sm:$0xf] %v1035
          %1100 = vst [vmem:[%s233 + $0x14] sm:$0xf] %v1036
          %1101 = vst [vmem:[%s233 + $0x18] sm:$0xf] %v1037
          %1102 = vst [vmem:[%s233 + $0x1c] sm:$0xf] %v1038
          %1103 = vst [vmem:[%s233 + $0x20] sm:$0xf] %v1039
          %1104 = vst [vmem:[%s233 + $0x24] sm:$0xf] %v1040
          %1105 = vst [vmem:[%s233 + $0x28] sm:$0xf] %v1041
          %1106 = vst [vmem:[%s233 + $0x2c] sm:$0xf] %v1042
          %1107 = vst [vmem:[%s233 + $0x30] sm:$0xf] %v1043
          %1108 = vst [vmem:[%s233 + $0x34] sm:$0xf] %v1044
          %1109 = vst [vmem:[%s233 + $0x38] sm:$0xf] %v1045
          %1110 = vst [vmem:[%s233 + $0x3c] sm:$0xf] %v1046
          %1111 = vst [vmem:[%s233 + $0x40] sm:$0xf] %v1047
          %1112 = vst [vmem:[%s233 + $0x44] sm:$0xf] %v1048
          %1113 = vst [vmem:[%s233 + $0x48] sm:$0xf] %v1049
          %1114 = vst [vmem:[%s233 + $0x4c] sm:$0xf] %v1050
          %1115 = vst [vmem:[%s233 + $0x50] sm:$0xf] %v1051
          %1116 = vst [vmem:[%s233 + $0x54] sm:$0xf] %v1052
          %1117 = vst [vmem:[%s233 + $0x58] sm:$0xf] %v1053
          %1118 = vst [vmem:[%s233 + $0x5c] sm:$0xf] %v1054
          %1119 = vst [vmem:[%s233 + $0x60] sm:$0xf] %v1055
          %1120 = vst [vmem:[%s233 + $0x64] sm:$0xf] %v1056
          %1121 = vst [vmem:[%s233 + $0x68] sm:$0xf] %v1057
          %1122 = vst [vmem:[%s233 + $0x6c] sm:$0xf] %v1058
          %1123 = vst [vmem:[%s233 + $0x70] sm:$0xf] %v1059
          %1124 = vst [vmem:[%s233 + $0x74] sm:$0xf] %v1060
          %1125 = vst [vmem:[%s233 + $0x78] sm:$0xf] %v1061
          %1126 = vst [vmem:[%s233 + $0x7c] sm:$0xf] %v1062
        $region40: #{conv_im2col.1} parent=31 // pred_fallthru
          _
        %s1127 = sand.u32 %s128, 1
        %s1128 = scalar_lea.sflag [#allocation4], %s1127
        %s1129 = sand.u32 %s128, 1
        %s1130 = smul.addr %s1129, 128
        %s1131 = scalar_lea.vmem [#allocation3], %s1130
        // Predicated region
        $region41: #{conv_im2col.1} parent=31 // pred_check
          %p1132 = pneg %p138
        $region42: #{conv_im2col.1} parent=31 // pred_check_branch
          %1134 = sbr.rel (%p1132) target = $region44
        $region43: #{conv_im2col.1} parent=31 // pred_region
          %s1135 = smul.u32 32, %s22
          %s1137 = ssub.s32 2048, 2048
          %1138 = vsyncadd %s1128, %s1137
          %s1139 = sadd.s32 %s23, %s1135
          %s1140 = smul.addr %s1139, 64
          %s1141 = scalar_lea.hbm %s3, %s1140
          %s1142 = sshll.u32 %s1131, 4
          %s1143 = int_to_ptr.vmem [resolvable:$true] %s1142
          %1148 = dma.vmem_to_hbm [thread:$0]  %s1143, 2048, %s1141, %s1128, 64, 64, 4
        $region44: #{conv_im2col.1} parent=31 // pred_fallthru
          _
      $region32: #{conv_im2col.1} parent=5 // pred_fallthru
        _
      %p1149 = scmp.le.s32.totalorder 2, %s12
      // Predicated region
      $region45: #{conv_im2col.1} parent=5 // pred_check
        %p1150 = pneg %p1149
      $region46: #{conv_im2col.1} parent=5 // pred_check_branch
        %1152 = sbr.rel (%p1150) target = $region48
      $region47: #{conv_im2col.1} parent=5 // pred_region
        %s1153 = ssub.s32 %s12, 2
        // Predicated region
        $region49: #{conv_im2col.1} parent=47 // pred_check
          %p1154 = pneg %p144
        $region50: #{conv_im2col.1} parent=47 // pred_check_branch
          %1156 = sbr.rel (%p1154) target = $region52
        $region51: #{conv_im2col.1} parent=47 // pred_region
          %s1157 = sand.u32 %s129, 1
          %s1158 = scalar_lea.sflag [#allocation4], %s1157
          %s1159 = sand.u32 %s129, 1
          %s1160 = smul.addr %s1159, 128
          %s1161 = scalar_lea.vmem [#allocation3], %s1160
          %1162 = dma.done %s1158, 2048
        $region52: #{conv_im2col.1} parent=47 // pred_fallthru
          _
      $region48: #{conv_im2col.1} parent=5 // pred_fallthru
        _
    $region6: #{conv_im2col.1} parent=1 // loop_footer
      %s16 = sadd.s32 1, %s12
    $region7: #{conv_im2col.1} parent=1 // loop_footer_branch
      %11 = sbr.rel target = $region3
    $region8: #{conv_im2col.1} parent=1 // loop_exit
      _
    %1163 = vsyncpa [#allocation4], 1
    %s1164 = scalar_lea.sflag [#allocation4], 1
    %1165 = vsyncpa %s1164, 1

</llo_original>
